<compile_context>
chip_gen: v6e
topology: v6e:2x2x1
jax: 0.10.0
libtpu: 0.0.40
codegen_flags: <defaults>
</compile_context>

<pallas_src>
import math

import jax
import jax.numpy as jnp
from jax import lax
from jax.experimental import pallas as pl
from jax.experimental.pallas import tpu as pltpu

OUT_SIZE = (4, 8, 16, 16)      # original out_size
FLAT_OUT = (4, 8, 256)         # out_size after flattening trailing dims
MID_SIZE = (2, 4, 128)         # hidden size produced by the mlp KronLinear
IN_SIZE = (1, 2, 64)           # decoder input size (== self.in_size)

_CDIMS = (((1,), (0,)), ((), ()))   # plain (M, K) @ (K, N)


def _decoder_kernel(x_ref,                       # (2, 64)    f32   flattened (a*b, c) input
                    wmk_ref,                     # (8, 2)     f32   kron(w_m0, w_m1)
                    wm2t_ref,                    # (64, 128)  bf16  w_m2 pre-transposed
                    bm_ref,                      # (8, 128)   bf16  mlp bias, flattened
                    wlk_ref,                     # (32, 8)    f32   kron(w_l0, w_l1)
                    wsk_ref,                     # (32, 8)    f32   kron(w_s0, w_s1)
                    wh2t_ref,                    # (128, 512) bf16  [w_l2.T | w_s2.T]
                    bl_ref,                      # (32, 256)  bf16
                    bs_ref,                      # (32, 256)  bf16
                    scale_ref, shift_ref):       # (32, 256)  f32 outputs
    f32 = jnp.float32
    bf16 = jnp.bfloat16

    # ---- mlp: ReLU -> KronLinear -> ReLU ----------------------------------------------
    x = jnp.maximum(x_ref[...], 0.0).astype(bf16)                       # (2, 64)
    y = lax.dot_general(x, wm2t_ref[...], _CDIMS,
                        preferred_element_type=f32)                     # (2, 128)  MXU
    # K=2 kron-factor contraction on the VPU (not the MXU): keeps the serial chain between
    # the two big MXU matmuls short.  y_new[i,:] = wmk[i,0]*y[0,:] + wmk[i,1]*y[1,:]
    wmk = wmk_ref[...]                                                  # (8, 2)  f32
    h = wmk[:, 0:1] * y[0:1, :] + wmk[:, 1:2] * y[1:2, :]               # (8, 128) f32
    h = jnp.maximum(h + bm_ref[...].astype(f32), 0.0)                   # (8, 128) f32
    hb = h.astype(bf16)

    # ---- fused heads: one wide MXU matmul, then per-head kron-factor matmuls ----------
    slab = lax.dot_general(hb, wh2t_ref[...], _CDIMS,
                           preferred_element_type=f32)                  # (8, 512)  MXU
    # static, lane-tile-aligned slices (columns 0:256 / 256:512) -> no relayout
    ls = lax.dot_general(wlk_ref[...], slab[:, :256], _CDIMS,
                         preferred_element_type=f32) + bl_ref[...].astype(f32)   # (32, 256)
    sh = lax.dot_general(wsk_ref[...], slab[:, 256:], _CDIMS,
                         preferred_element_type=f32) + bs_ref[...].astype(f32)   # (32, 256)

    scale_ref[...] = jnp.exp(ls)     # log_scale(features).exp()   (EUP, f32)
    shift_ref[...] = sh              # shift(features)


def _pinned(shape):
    """Weight BlockSpec: full block, always block 0 -> stays VMEM-resident across the grid."""
    ndim = len(shape)
    return pl.BlockSpec(shape, lambda b, _n=ndim: (0,) * _n)


@jax.jit
def kron_mlp_decoder_batched(xb, prepared):
    """xb: (N, 1, 2, 64) f32 — N independent decoder invocations folded into one grid.

    prepared: output of prepare_params().
    Returns (scale, shift), each (N, 4, 8, 16, 16) f32.
    """
    p = prepared
    N = xb.shape[0]
    x3d = xb.reshape(N, 2, 64)   # (N, a, b, c) -> (N, a*b, c); free, layout-preserving glue

    scale, shift = pl.pallas_call(
        _decoder_kernel,
        grid_spec=pltpu.PrefetchScalarGridSpec(
            num_scalar_prefetch=0,
            grid=(N,),
            in_specs=[
                pl.BlockSpec((None, 2, 64), lambda b: (b, 0, 0)),     # per-step x block
                _pinned((8, 2)),        # wm_kron
                _pinned((64, 128)),     # wm2t
                _pinned((8, 128)),      # bm
                _pinned((32, 8)),       # wl_kron
                _pinned((32, 8)),       # ws_kron
                _pinned((128, 512)),    # wh2t
                _pinned((32, 256)),     # bl
                _pinned((32, 256)),     # bs
            ],
            out_specs=(pl.BlockSpec((None, 32, 256), lambda b: (b, 0, 0)),
                       pl.BlockSpec((None, 32, 256), lambda b: (b, 0, 0))),
        ),
        out_shape=(jax.ShapeDtypeStruct((N, 32, 256), jnp.float32),
                   jax.ShapeDtypeStruct((N, 32, 256), jnp.float32)),
        compiler_params=pltpu.CompilerParams(
            dimension_semantics=("parallel",)),   # v7x: shard batch across both TCs
    )(x3d, p['wm_kron'], p['wm2t'], p['bm'],
      p['wl_kron'], p['ws_kron'], p['wh2t'], p['bl'], p['bs'])

    # nn.Unflatten(2, (16, 16)) + un-flatten of the (A*B) rows — pure glue reshape
    return scale.reshape((N,) + OUT_SIZE), shift.reshape((N,) + OUT_SIZE)


@jax.jit
def kron_mlp_decoder(x, prepared):
    """Single-sample entry point matching the PyTorch module: x is (1, 2, 64)."""
    scale, shift = kron_mlp_decoder_batched(x[None], prepared)
    return scale[0], shift[0]


# ----------------------------- one-time parameter packing ----------------------------------

def prepare_params(params):
    """Pack raw (PyTorch-layout) params into the kernel's fused / pre-transposed layout.

    Runs once, outside the jitted forward: kron(w0, w1) factors, pre-transposed big weights,
    head weight concatenation, flattened biases (bf16), and bf16 casts for the MXU operands.
    """
    p = params
    bf16 = jnp.bfloat16
    f32 = jnp.float32
    return {
        # mlp KronLinear (1,2,64) -> (2,4,128)
        'wm_kron': jnp.kron(p['w_m0'], p['w_m1']).astype(f32),                      # (8, 2)
        'wm2t':    p['w_m2'].T.astype(bf16),                                        # (64, 128)
        'bm':      p['b_m'].reshape(8, 128).astype(bf16),
        # heads (2,4,128) -> (4,8,256), big factors fused column-wise
        'wl_kron': jnp.kron(p['w_l0'], p['w_l1']).astype(f32),                      # (32, 8)
        'ws_kron': jnp.kron(p['w_s0'], p['w_s1']).astype(f32),                      # (32, 8)
        'wh2t':    jnp.concatenate([p['w_l2'].T, p['w_s2'].T], axis=1).astype(bf16),  # (128, 512)
        'bl':      p['b_l'].reshape(32, 256).astype(bf16),
        'bs':      p['b_s'].reshape(32, 256).astype(bf16),
    }


# ----------------------------- reference (pure JAX, PyTorch semantics) ----------------------

def _kron_linear_ref(x, w0, w1, w2, b):
    # Matches KronLinear.forward's sequential einsum chain exactly.
    x = jnp.einsum('ij,jbc->ibc', w0, x)
    x = jnp.einsum('ij,ajc->aic', w1, x)
    x = jnp.einsum('ij,abj->abi', w2, x)
    return x + b


def _decoder_ref(x, p):
    h = jnp.maximum(x, 0.0)
    h = _kron_linear_ref(h, p['w_m0'], p['w_m1'], p['w_m2'], p['b_m'])
    h = jnp.maximum(h, 0.0)
    scale = jnp.exp(_kron_linear_ref(h, p['w_l0'], p['w_l1'], p['w_l2'], p['b_l']))
    shift = _kron_linear_ref(h, p['w_s0'], p['w_s1'], p['w_s2'], p['b_s'])
    return scale.reshape(OUT_SIZE), shift.reshape(OUT_SIZE)


# ----------------------------- deterministic parameter init ---------------------------------

def init_params(key):
    def kaiming_uniform(k, shape):
        # PyTorch kaiming_uniform_(a=sqrt(5)) on an (out, in) weight -> U(-1/sqrt(in), 1/sqrt(in))
        bound = 1.0 / math.sqrt(shape[1])
        return jax.random.uniform(k, shape, jnp.float32, -bound, bound)

    ks = jax.random.split(key, 12)
    return {
        # mlp KronLinear: (1, 2, 64) -> (2, 4, 128)
        'w_m0': kaiming_uniform(ks[0], (2, 1)),
        'w_m1': kaiming_uniform(ks[1], (4, 2)),
        'w_m2': kaiming_uniform(ks[2], (128, 64)),
        'b_m': 0.01 * jax.random.normal(ks[3], MID_SIZE, jnp.float32),
        # log_scale / shift heads: (2, 4, 128) -> (4, 8, 256)
        # NOTE: the PyTorch module uses zero_init=True + zero bias for these heads
        # (which makes scale==1, shift==0); small random values are used here so the
        # kernel compute path is actually exercised.
        'w_l0': kaiming_uniform(ks[4], (4, 2)),
        'w_l1': kaiming_uniform(ks[5], (8, 4)),
        'w_l2': kaiming_uniform(ks[6], (256, 128)),
        'b_l': 0.01 * jax.random.normal(ks[7], FLAT_OUT, jnp.float32),
        'w_s0': kaiming_uniform(ks[8], (4, 2)),
        'w_s1': kaiming_uniform(ks[9], (8, 4)),
        'w_s2': kaiming_uniform(ks[10], (256, 128)),
        'b_s': 0.01 * jax.random.normal(ks[11], FLAT_OUT, jnp.float32),
    }


if __name__ == "__main__":
    key = jax.random.PRNGKey(0)
    kp, kx = jax.random.split(key)
    params = init_params(kp)
    prepared = prepare_params(params)

    # Batched demo: N independent decoder invocations amortized over one pallas_call grid.
    N = 8
    xb = jax.random.normal(kx, (N,) + IN_SIZE, jnp.float32)

    scale, shift = kron_mlp_decoder_batched(xb, prepared)
    jax.block_until_ready((scale, shift))

    scale_ref, shift_ref = jax.vmap(lambda x: _decoder_ref(x, params))(xb)
    assert scale.shape == (N,) + OUT_SIZE and shift.shape == (N,) + OUT_SIZE
    assert jnp.allclose(scale, scale_ref, rtol=2e-2, atol=2e-3)
    assert jnp.allclose(shift, shift_ref, rtol=2e-2, atol=2e-3)

    # Single-sample path (original PyTorch forward semantics: input has no batch dim).
    s1, h1 = kron_mlp_decoder(xb[0], prepared)
    jax.block_until_ready((s1, h1))
    assert jnp.allclose(s1, scale_ref[0], rtol=2e-2, atol=2e-3)
    assert jnp.allclose(h1, shift_ref[0], rtol=2e-2, atol=2e-3)

    print("KERNEL_OK")
</pallas_src>

<mosaic_0001>
module attributes {stable_mosaic.version = 11 : i64} {
  func.func @_decoder_kernel(%arg0: i32, %arg1: memref<1x2x64xf32, #tpu.memory_space<vmem>>, %arg2: memref<8x2xf32, #tpu.memory_space<vmem>>, %arg3: memref<64x128xbf16, #tpu.memory_space<vmem>>, %arg4: memref<8x128xbf16, #tpu.memory_space<vmem>>, %arg5: memref<32x8xf32, #tpu.memory_space<vmem>>, %arg6: memref<32x8xf32, #tpu.memory_space<vmem>>, %arg7: memref<128x512xbf16, #tpu.memory_space<vmem>>, %arg8: memref<32x256xbf16, #tpu.memory_space<vmem>>, %arg9: memref<32x256xbf16, #tpu.memory_space<vmem>>, %arg10: memref<1x32x256xf32, #tpu.memory_space<vmem>>, %arg11: memref<1x32x256xf32, #tpu.memory_space<vmem>>) attributes {dimension_semantics = [#tpu.dimension_semantics<parallel>], iteration_bounds = array<i64: 8>, scalar_prefetch = 0 : i64, scratch_operands = 0 : i64, tpu.core_type = #tpu.core_type<tc>, window_params = [{transform_indices = @transform_0, window_bounds = array<i64: 1, 2, 64>}, {pipeline_mode = #tpu.pipeline_mode<synchronous>, transform_indices = @transform_1, window_bounds = array<i64: 8, 2>}, {pipeline_mode = #tpu.pipeline_mode<synchronous>, transform_indices = @transform_2, window_bounds = array<i64: 64, 128>}, {pipeline_mode = #tpu.pipeline_mode<synchronous>, transform_indices = @transform_3, window_bounds = array<i64: 8, 128>}, {pipeline_mode = #tpu.pipeline_mode<synchronous>, transform_indices = @transform_4, window_bounds = array<i64: 32, 8>}, {pipeline_mode = #tpu.pipeline_mode<synchronous>, transform_indices = @transform_5, window_bounds = array<i64: 32, 8>}, {pipeline_mode = #tpu.pipeline_mode<synchronous>, transform_indices = @transform_6, window_bounds = array<i64: 128, 512>}, {pipeline_mode = #tpu.pipeline_mode<synchronous>, transform_indices = @transform_7, window_bounds = array<i64: 32, 256>}, {pipeline_mode = #tpu.pipeline_mode<synchronous>, transform_indices = @transform_8, window_bounds = array<i64: 32, 256>}, {transform_indices = @transform_9, window_bounds = array<i64: 1, 32, 256>}, {transform_indices = @transform_10, window_bounds = array<i64: 1, 32, 256>}]} {
    %c0 = arith.constant 0 : index
    %c0_0 = arith.constant 0 : index
    %c0_1 = arith.constant 0 : index
    %0 = vector.load %arg1[%c0, %c0_0, %c0_1] : memref<1x2x64xf32, #tpu.memory_space<vmem>>, vector<1x2x64xf32>
    %1 = vector.shape_cast %0 : vector<1x2x64xf32> to vector<2x64xf32>
    %cst = arith.constant 0.000000e+00 : f32
    %2 = vector.broadcast %cst : f32 to vector<2x64xf32>
    %3 = arith.maximumf %1, %2 : vector<2x64xf32>
    %4 = arith.truncf %3 : vector<2x64xf32> to vector<2x64xbf16>
    %c0_2 = arith.constant 0 : index
    %c0_3 = arith.constant 0 : index
    %5 = vector.load %arg3[%c0_2, %c0_3] : memref<64x128xbf16, #tpu.memory_space<vmem>>, vector<64x128xbf16>
    %cst_4 = arith.constant dense<0.000000e+00> : vector<2x128xf32>
    %6 = tpu.matmul %4, %5, %cst_4 {dimension_numbers = #tpu.dot_dimension_numbers<[1], [0], [0], [1], [0, 0, 1, 1], [], []>} : vector<2x64xbf16>, vector<64x128xbf16>, vector<2x128xf32> -> vector<2x128xf32>
    %c0_5 = arith.constant 0 : index
    %c0_6 = arith.constant 0 : index
    %7 = vector.load %arg2[%c0_5, %c0_6] : memref<8x2xf32, #tpu.memory_space<vmem>>, vector<8x2xf32>
    %8 = vector.extract_strided_slice %7 {offsets = [0, 0], sizes = [8, 1], strides = [1, 1]} : vector<8x2xf32> to vector<8x1xf32>
    %9 = vector.extract_strided_slice %6 {offsets = [0, 0], sizes = [1, 128], strides = [1, 1]} : vector<2x128xf32> to vector<1x128xf32>
    %10 = vector.broadcast %8 : vector<8x1xf32> to vector<8x128xf32>
    %11 = vector.broadcast %9 : vector<1x128xf32> to vector<8x128xf32>
    %12 = arith.mulf %10, %11 : vector<8x128xf32>
    %13 = vector.extract_strided_slice %7 {offsets = [0, 1], sizes = [8, 1], strides = [1, 1]} : vector<8x2xf32> to vector<8x1xf32>
    %14 = vector.extract_strided_slice %6 {offsets = [1, 0], sizes = [1, 128], strides = [1, 1]} : vector<2x128xf32> to vector<1x128xf32>
    %15 = vector.broadcast %13 : vector<8x1xf32> to vector<8x128xf32>
    %16 = vector.broadcast %14 : vector<1x128xf32> to vector<8x128xf32>
    %17 = arith.mulf %15, %16 : vector<8x128xf32>
    %18 = arith.addf %12, %17 : vector<8x128xf32>
    %c0_7 = arith.constant 0 : index
    %c0_8 = arith.constant 0 : index
    %19 = vector.load %arg4[%c0_7, %c0_8] : memref<8x128xbf16, #tpu.memory_space<vmem>>, vector<8x128xbf16>
    %20 = arith.extf %19 : vector<8x128xbf16> to vector<8x128xf32>
    %21 = arith.addf %18, %20 : vector<8x128xf32>
    %cst_9 = arith.constant 0.000000e+00 : f32
    %22 = vector.broadcast %cst_9 : f32 to vector<8x128xf32>
    %23 = arith.maximumf %21, %22 : vector<8x128xf32>
    %24 = arith.truncf %23 : vector<8x128xf32> to vector<8x128xbf16>
    %c0_10 = arith.constant 0 : index
    %c0_11 = arith.constant 0 : index
    %25 = vector.load %arg7[%c0_10, %c0_11] : memref<128x512xbf16, #tpu.memory_space<vmem>>, vector<128x512xbf16>
    %cst_12 = arith.constant dense<0.000000e+00> : vector<8x512xf32>
    %26 = tpu.matmul %24, %25, %cst_12 {dimension_numbers = #tpu.dot_dimension_numbers<[1], [0], [0], [1], [0, 0, 1, 1], [], []>} : vector<8x128xbf16>, vector<128x512xbf16>, vector<8x512xf32> -> vector<8x512xf32>
    %c0_13 = arith.constant 0 : index
    %c0_14 = arith.constant 0 : index
    %27 = vector.load %arg5[%c0_13, %c0_14] : memref<32x8xf32, #tpu.memory_space<vmem>>, vector<32x8xf32>
    %28 = vector.extract_strided_slice %26 {offsets = [0, 0], sizes = [8, 256], strides = [1, 1]} : vector<8x512xf32> to vector<8x256xf32>
    %cst_15 = arith.constant dense<0.000000e+00> : vector<32x256xf32>
    %29 = tpu.matmul %27, %28, %cst_15 {dimension_numbers = #tpu.dot_dimension_numbers<[1], [0], [0], [1], [0, 0, 1, 1], [], []>} : vector<32x8xf32>, vector<8x256xf32>, vector<32x256xf32> -> vector<32x256xf32>
    %c0_16 = arith.constant 0 : index
    %c0_17 = arith.constant 0 : index
    %30 = vector.load %arg8[%c0_16, %c0_17] : memref<32x256xbf16, #tpu.memory_space<vmem>>, vector<32x256xbf16>
    %31 = arith.extf %30 : vector<32x256xbf16> to vector<32x256xf32>
    %32 = arith.addf %29, %31 : vector<32x256xf32>
    %c0_18 = arith.constant 0 : index
    %c0_19 = arith.constant 0 : index
    %33 = vector.load %arg6[%c0_18, %c0_19] : memref<32x8xf32, #tpu.memory_space<vmem>>, vector<32x8xf32>
    %34 = vector.extract_strided_slice %26 {offsets = [0, 256], sizes = [8, 256], strides = [1, 1]} : vector<8x512xf32> to vector<8x256xf32>
    %cst_20 = arith.constant dense<0.000000e+00> : vector<32x256xf32>
    %35 = tpu.matmul %33, %34, %cst_20 {dimension_numbers = #tpu.dot_dimension_numbers<[1], [0], [0], [1], [0, 0, 1, 1], [], []>} : vector<32x8xf32>, vector<8x256xf32>, vector<32x256xf32> -> vector<32x256xf32>
    %c0_21 = arith.constant 0 : index
    %c0_22 = arith.constant 0 : index
    %36 = vector.load %arg9[%c0_21, %c0_22] : memref<32x256xbf16, #tpu.memory_space<vmem>>, vector<32x256xbf16>
    %37 = arith.extf %36 : vector<32x256xbf16> to vector<32x256xf32>
    %38 = arith.addf %35, %37 : vector<32x256xf32>
    %39 = math.exp %32 : vector<32x256xf32>
    %c0_23 = arith.constant 0 : index
    %c0_24 = arith.constant 0 : index
    %c0_25 = arith.constant 0 : index
    %40 = vector.load %arg10[%c0_23, %c0_24, %c0_25] : memref<1x32x256xf32, #tpu.memory_space<vmem>>, vector<1x32x256xf32>
    %41 = vector.shape_cast %40 : vector<1x32x256xf32> to vector<32x256xf32>
    %42 = vector.shape_cast %39 : vector<32x256xf32> to vector<1x32x256xf32>
    tpu.vector_store %arg10[%c0_23, %c0_24, %c0_25], %42 {strides = array<i32>} : memref<1x32x256xf32, #tpu.memory_space<vmem>>, vector<1x32x256xf32>,
    %c0_26 = arith.constant 0 : index
    %c0_27 = arith.constant 0 : index
    %c0_28 = arith.constant 0 : index
    %43 = vector.load %arg11[%c0_26, %c0_27, %c0_28] : memref<1x32x256xf32, #tpu.memory_space<vmem>>, vector<1x32x256xf32>
    %44 = vector.shape_cast %43 : vector<1x32x256xf32> to vector<32x256xf32>
    %45 = vector.shape_cast %38 : vector<32x256xf32> to vector<1x32x256xf32>
    tpu.vector_store %arg11[%c0_26, %c0_27, %c0_28], %45 {strides = array<i32>} : memref<1x32x256xf32, #tpu.memory_space<vmem>>, vector<1x32x256xf32>,
    return
  }
  func.func @transform_0(%arg0: i32) -> (i32, i32, i32) {
    %c0_i32 = arith.constant 0 : i32
    %c0_i32_0 = arith.constant 0 : i32
    %c0_i32_1 = arith.constant 0 : i32
    return %arg0, %c0_i32, %c0_i32_0 : i32, i32, i32
  }
  func.func @transform_1(%arg0: i32) -> (i32, i32) {
    %c0_i32 = arith.constant 0 : i32
    %c0_i32_0 = arith.constant 0 : i32
    %c0_i32_1 = arith.constant 0 : i32
    return %c0_i32, %c0_i32_0 : i32, i32
  }
  func.func @transform_2(%arg0: i32) -> (i32, i32) {
    %c0_i32 = arith.constant 0 : i32
    %c0_i32_0 = arith.constant 0 : i32
    %c0_i32_1 = arith.constant 0 : i32
    return %c0_i32, %c0_i32_0 : i32, i32
  }
  func.func @transform_3(%arg0: i32) -> (i32, i32) {
    %c0_i32 = arith.constant 0 : i32
    %c0_i32_0 = arith.constant 0 : i32
    %c0_i32_1 = arith.constant 0 : i32
    return %c0_i32, %c0_i32_0 : i32, i32
  }
  func.func @transform_4(%arg0: i32) -> (i32, i32) {
    %c0_i32 = arith.constant 0 : i32
    %c0_i32_0 = arith.constant 0 : i32
    %c0_i32_1 = arith.constant 0 : i32
    return %c0_i32, %c0_i32_0 : i32, i32
  }
  func.func @transform_5(%arg0: i32) -> (i32, i32) {
    %c0_i32 = arith.constant 0 : i32
    %c0_i32_0 = arith.constant 0 : i32
    %c0_i32_1 = arith.constant 0 : i32
    return %c0_i32, %c0_i32_0 : i32, i32
  }
  func.func @transform_6(%arg0: i32) -> (i32, i32) {
    %c0_i32 = arith.constant 0 : i32
    %c0_i32_0 = arith.constant 0 : i32
    %c0_i32_1 = arith.constant 0 : i32
    return %c0_i32, %c0_i32_0 : i32, i32
  }
  func.func @transform_7(%arg0: i32) -> (i32, i32) {
    %c0_i32 = arith.constant 0 : i32
    %c0_i32_0 = arith.constant 0 : i32
    %c0_i32_1 = arith.constant 0 : i32
    return %c0_i32, %c0_i32_0 : i32, i32
  }
  func.func @transform_8(%arg0: i32) -> (i32, i32) {
    %c0_i32 = arith.constant 0 : i32
    %c0_i32_0 = arith.constant 0 : i32
    %c0_i32_1 = arith.constant 0 : i32
    return %c0_i32, %c0_i32_0 : i32, i32
  }
  func.func @transform_9(%arg0: i32) -> (i32, i32, i32) {
    %c0_i32 = arith.constant 0 : i32
    %c0_i32_0 = arith.constant 0 : i32
    %c0_i32_1 = arith.constant 0 : i32
    return %arg0, %c0_i32, %c0_i32_0 : i32, i32, i32
  }
  func.func @transform_10(%arg0: i32) -> (i32, i32, i32) {
    %c0_i32 = arith.constant 0 : i32
    %c0_i32_0 = arith.constant 0 : i32
    %c0_i32_1 = arith.constant 0 : i32
    return %arg0, %c0_i32, %c0_i32_0 : i32, i32, i32
  }
}

</mosaic_0001>

<llo_original>
// kernel: kron_mlp_decoder_batched.1
$region0: #{kron_mlp_decoder_batched.1}
  #allocation0 [shape = 'u32[]', space=smem, size = 0x4, offset = 0x4, fixed_abs, tag = 'smem constant byte address 0x4 - core index']
  #allocation1 [shape = 'u32[144,128]{1,0:T(1,128)}', space=vmem, size = 0x12000, scoped, tag = 'internal scratch']
  %s0 = inlined_call_operand.hbm [shape: f32[8,2,64], index: 0, kind: input, shape index: {}]
  %s1 = inlined_call_operand.vmem [shape: f32[8,2], index: 1, kind: input, shape index: {}]
  %s2 = inlined_call_operand.hbm [shape: bf16[64,128], index: 2, kind: input, shape index: {}]
  %s3 = inlined_call_operand.hbm [shape: bf16[8,128], index: 3, kind: input, shape index: {}]
  %s4 = inlined_call_operand.vmem [shape: f32[32,8], index: 4, kind: input, shape index: {}]
  %s5 = inlined_call_operand.vmem [shape: f32[32,8], index: 5, kind: input, shape index: {}]
  %s6 = inlined_call_operand.hbm [shape: bf16[128,512], index: 6, kind: input, shape index: {}]
  %s7 = inlined_call_operand.hbm [shape: bf16[32,256], index: 7, kind: input, shape index: {}]
  %s8 = inlined_call_operand.hbm [shape: bf16[32,256], index: 8, kind: input, shape index: {}]
  %s9 = inlined_call_operand.vmem [shape: f32[8,32,256], index: 9, kind: output, shape index: {0}]
  %s10 = inlined_call_operand.vmem [shape: f32[8,32,256], index: 10, kind: output, shape index: {1}]
  %11 = xla_tuple %s9, %s10
  %s12 = sld [smem:[#allocation0]]
  $region101: #{kron_mlp_decoder_batched.1} parent=0
    _
  %s14 = ssub.s32 1, %s12
  %s15 = scalar_select 0, %s14, %s12
  $region1: #{kron_mlp_decoder_batched.1} parent=0
    #allocation2 [shape = 'u8[2048]{0}', space=vmem, size = 0x800, scoped, tag = 'input window, operand 0']
    #allocation3 [shape = 's32[2]{0}', space=sflag, size = 0x8, scoped, tag = 'scoped memory for kron_mlp_decoder_batched.1']
    #allocation4 [shape = 'u8[16384]{0}', space=vmem, size = 0x4000, scoped, tag = 'input window, operand 2, single buffered']
    #allocation5 [shape = 's32[1]{0}', space=sflag, size = 0x4, scoped, tag = 'scoped memory for kron_mlp_decoder_batched.1']
    #allocation6 [shape = 'u8[2048]{0}', space=vmem, size = 0x800, scoped, tag = 'input window, operand 3, single buffered']
    #allocation7 [shape = 'u8[131072]{0}', space=vmem, size = 0x20000, scoped, tag = 'input window, operand 6, single buffered']
    #allocation8 [shape = 's32[1]{0}', space=sflag, size = 0x4, scoped, tag = 'scoped memory for kron_mlp_decoder_batched.1']
    #allocation9 [shape = 'u8[16384]{0}', space=vmem, size = 0x4000, scoped, tag = 'input window, operand 7, single buffered']
    #allocation10 [shape = 'u8[16384]{0}', space=vmem, size = 0x4000, scoped, tag = 'input window, operand 8, single buffered']
    #allocation11 [shape = 's32[1]{0}', space=sflag, size = 0x4, scoped, tag = 'scoped memory for kron_mlp_decoder_batched.1']
    %16 = vsyncpa [#allocation3], 0
    %s17 = scalar_lea.sflag [#allocation3], 1
    %18 = vsyncpa %s17, 0
    %19 = vsyncpa [#allocation5], 0
    %20 = vsyncpa [#allocation8], 0
    %21 = vsyncpa [#allocation11], 0
    loop: start=0, step=1, limit=10
    $region2: #{kron_mlp_decoder_batched.1} parent=1 // loop_pre_header
      _
    $region3: #{kron_mlp_decoder_batched.1} parent=1 // loop_header
      %s23 = sphi 0, %s27
      %p24 = scmp.ge.s32.totalorder %s23, 10
      %s33 = sphi 0, %s35
      %s36 = sphi 0, %s33
      %s37 = sphi 0, %s36
      %s53 = sphi 0, %s37
      %s57 = sphi 0, %s57
      %s59 = sphi 0, %s57
      %s60 = sphi 0, %s59
      %s74 = sphi 0, %s60
      %s78 = sphi 0, %s78
      %s80 = sphi 0, %s78
      %s81 = sphi 0, %s80
      %s95 = sphi 0, %s81
      %s99 = sphi 0, %s99
      %s101 = sphi 0, %s99
      %s102 = sphi 0, %s101
      %s116 = sphi 0, %s102
      %s120 = sphi 0, %s120
      %s122 = sphi 0, %s120
      %s123 = sphi 0, %s122
      %s137 = sphi 0, %s123
      %s141 = sphi 0, %s141
      %s143 = sphi 0, %s141
      %s144 = sphi 0, %s143
      %s158 = sphi 0, %s144
      %s162 = sphi 0, %s162
      %s164 = sphi 0, %s162
      %s165 = sphi 0, %s164
      %s179 = sphi 0, %s165
      %s183 = sphi 0, %s183
      %s185 = sphi 0, %s183
      %s186 = sphi 0, %s185
      %s200 = sphi 0, %s186
      %s204 = sphi 0, %s204
      %s206 = sphi 0, %s204
      %s207 = sphi 0, %s206
      %s221 = sphi 0, %s207
      %s227 = sphi 0, %s229
      %s230 = sphi 0, %s227
      %s231 = sphi 0, %s230
      %s247 = sphi 0, %s231
      %s253 = sphi 0, %s255
      %s256 = sphi 0, %s253
      %s257 = sphi 0, %s256
      %s273 = sphi 0, %s257
    $region4: #{kron_mlp_decoder_batched.1} parent=1 // loop_header_branch
      %26 = sbr.rel (%p24) target = $region8
    $region5: #{kron_mlp_decoder_batched.1} parent=1 // loop_body
      %s28 = ssub.s32 %s23, 1
      %s29 = ssub.s32 %s23, 2
      %s30 = sadd.s32 %s23, 1
      %s31 = ssub.s32 %s23, %s30
      %p32 = scmp.eq.s32.totalorder %s31, 0
      %s34 = sadd.s32 %s33, 1
      %s35 = scalar_select %p32, %s33, %s34
      %p38 = pneg %p32
      %p39 = scmp.eq.s32.totalorder %s23, 7
      %p40 = por %p38, %p39
      %p41 = scmp.ne.s32.totalorder %s33, %s36
      %p42 = scmp.eq.s32.totalorder %s23, 0
      %p43 = por %p41, %p42
      %p44 = scmp.ne.s32.totalorder %s33, %s36
      %p45 = scmp.eq.s32.totalorder %s28, 7
      %p46 = por %p44, %p45
      %p47 = scmp.ne.s32.totalorder %s36, %s37
      %p48 = scmp.eq.s32.totalorder %s28, 0
      %p49 = por %p47, %p48
      %p50 = scmp.ne.s32.totalorder %s36, %s37
      %p51 = scmp.eq.s32.totalorder %s29, 7
      %p52 = por %p50, %p51
      %p54 = scmp.ne.s32.totalorder %s37, %s53
      %p55 = scmp.eq.s32.totalorder %s29, 0
      %p56 = por %p54, %p55
      %s58 = sadd.s32 %s57, 1
      %p61 = scmp.eq.s32.totalorder %s23, 7
      %p62 = scmp.ne.s32.totalorder %s57, %s59
      %p63 = scmp.eq.s32.totalorder %s23, 0
      %p64 = por %p62, %p63
      %p65 = scmp.ne.s32.totalorder %s57, %s59
      %p66 = scmp.eq.s32.totalorder %s28, 7
      %p67 = por %p65, %p66
      %p68 = scmp.ne.s32.totalorder %s59, %s60
      %p69 = scmp.eq.s32.totalorder %s28, 0
      %p70 = por %p68, %p69
      %p71 = scmp.ne.s32.totalorder %s59, %s60
      %p72 = scmp.eq.s32.totalorder %s29, 7
      %p73 = por %p71, %p72
      %p75 = scmp.ne.s32.totalorder %s60, %s74
      %p76 = scmp.eq.s32.totalorder %s29, 0
      %p77 = por %p75, %p76
      %s79 = sadd.s32 %s78, 1
      %p82 = scmp.eq.s32.totalorder %s23, 7
      %p83 = scmp.ne.s32.totalorder %s78, %s80
      %p84 = scmp.eq.s32.totalorder %s23, 0
      %p85 = por %p83, %p84
      %p86 = scmp.ne.s32.totalorder %s78, %s80
      %p87 = scmp.eq.s32.totalorder %s28, 7
      %p88 = por %p86, %p87
      %p89 = scmp.ne.s32.totalorder %s80, %s81
      %p90 = scmp.eq.s32.totalorder %s28, 0
      %p91 = por %p89, %p90
      %p92 = scmp.ne.s32.totalorder %s80, %s81
      %p93 = scmp.eq.s32.totalorder %s29, 7
      %p94 = por %p92, %p93
      %p96 = scmp.ne.s32.totalorder %s81, %s95
      %p97 = scmp.eq.s32.totalorder %s29, 0
      %p98 = por %p96, %p97
      %s100 = sadd.s32 %s99, 1
      %p103 = scmp.eq.s32.totalorder %s23, 7
      %p104 = scmp.ne.s32.totalorder %s99, %s101
      %p105 = scmp.eq.s32.totalorder %s23, 0
      %p106 = por %p104, %p105
      %p107 = scmp.ne.s32.totalorder %s99, %s101
      %p108 = scmp.eq.s32.totalorder %s28, 7
      %p109 = por %p107, %p108
      %p110 = scmp.ne.s32.totalorder %s101, %s102
      %p111 = scmp.eq.s32.totalorder %s28, 0
      %p112 = por %p110, %p111
      %p113 = scmp.ne.s32.totalorder %s101, %s102
      %p114 = scmp.eq.s32.totalorder %s29, 7
      %p115 = por %p113, %p114
      %p117 = scmp.ne.s32.totalorder %s102, %s116
      %p118 = scmp.eq.s32.totalorder %s29, 0
      %p119 = por %p117, %p118
      %s121 = sadd.s32 %s120, 1
      %p124 = scmp.eq.s32.totalorder %s23, 7
      %p125 = scmp.ne.s32.totalorder %s120, %s122
      %p126 = scmp.eq.s32.totalorder %s23, 0
      %p127 = por %p125, %p126
      %p128 = scmp.ne.s32.totalorder %s120, %s122
      %p129 = scmp.eq.s32.totalorder %s28, 7
      %p130 = por %p128, %p129
      %p131 = scmp.ne.s32.totalorder %s122, %s123
      %p132 = scmp.eq.s32.totalorder %s28, 0
      %p133 = por %p131, %p132
      %p134 = scmp.ne.s32.totalorder %s122, %s123
      %p135 = scmp.eq.s32.totalorder %s29, 7
      %p136 = por %p134, %p135
      %p138 = scmp.ne.s32.totalorder %s123, %s137
      %p139 = scmp.eq.s32.totalorder %s29, 0
      %p140 = por %p138, %p139
      %s142 = sadd.s32 %s141, 1
      %p145 = scmp.eq.s32.totalorder %s23, 7
      %p146 = scmp.ne.s32.totalorder %s141, %s143
      %p147 = scmp.eq.s32.totalorder %s23, 0
      %p148 = por %p146, %p147
      %p149 = scmp.ne.s32.totalorder %s141, %s143
      %p150 = scmp.eq.s32.totalorder %s28, 7
      %p151 = por %p149, %p150
      %p152 = scmp.ne.s32.totalorder %s143, %s144
      %p153 = scmp.eq.s32.totalorder %s28, 0
      %p154 = por %p152, %p153
      %p155 = scmp.ne.s32.totalorder %s143, %s144
      %p156 = scmp.eq.s32.totalorder %s29, 7
      %p157 = por %p155, %p156
      %p159 = scmp.ne.s32.totalorder %s144, %s158
      %p160 = scmp.eq.s32.totalorder %s29, 0
      %p161 = por %p159, %p160
      %s163 = sadd.s32 %s162, 1
      %p166 = scmp.eq.s32.totalorder %s23, 7
      %p167 = scmp.ne.s32.totalorder %s162, %s164
      %p168 = scmp.eq.s32.totalorder %s23, 0
      %p169 = por %p167, %p168
      %p170 = scmp.ne.s32.totalorder %s162, %s164
      %p171 = scmp.eq.s32.totalorder %s28, 7
      %p172 = por %p170, %p171
      %p173 = scmp.ne.s32.totalorder %s164, %s165
      %p174 = scmp.eq.s32.totalorder %s28, 0
      %p175 = por %p173, %p174
      %p176 = scmp.ne.s32.totalorder %s164, %s165
      %p177 = scmp.eq.s32.totalorder %s29, 7
      %p178 = por %p176, %p177
      %p180 = scmp.ne.s32.totalorder %s165, %s179
      %p181 = scmp.eq.s32.totalorder %s29, 0
      %p182 = por %p180, %p181
      %s184 = sadd.s32 %s183, 1
      %p187 = scmp.eq.s32.totalorder %s23, 7
      %p188 = scmp.ne.s32.totalorder %s183, %s185
      %p189 = scmp.eq.s32.totalorder %s23, 0
      %p190 = por %p188, %p189
      %p191 = scmp.ne.s32.totalorder %s183, %s185
      %p192 = scmp.eq.s32.totalorder %s28, 7
      %p193 = por %p191, %p192
      %p194 = scmp.ne.s32.totalorder %s185, %s186
      %p195 = scmp.eq.s32.totalorder %s28, 0
      %p196 = por %p194, %p195
      %p197 = scmp.ne.s32.totalorder %s185, %s186
      %p198 = scmp.eq.s32.totalorder %s29, 7
      %p199 = por %p197, %p198
      %p201 = scmp.ne.s32.totalorder %s186, %s200
      %p202 = scmp.eq.s32.totalorder %s29, 0
      %p203 = por %p201, %p202
      %s205 = sadd.s32 %s204, 1
      %p208 = scmp.eq.s32.totalorder %s23, 7
      %p209 = scmp.ne.s32.totalorder %s204, %s206
      %p210 = scmp.eq.s32.totalorder %s23, 0
      %p211 = por %p209, %p210
      %p212 = scmp.ne.s32.totalorder %s204, %s206
      %p213 = scmp.eq.s32.totalorder %s28, 7
      %p214 = por %p212, %p213
      %p215 = scmp.ne.s32.totalorder %s206, %s207
      %p216 = scmp.eq.s32.totalorder %s28, 0
      %p217 = por %p215, %p216
      %p218 = scmp.ne.s32.totalorder %s206, %s207
      %p219 = scmp.eq.s32.totalorder %s29, 7
      %p220 = por %p218, %p219
      %p222 = scmp.ne.s32.totalorder %s207, %s221
      %p223 = scmp.eq.s32.totalorder %s29, 0
      %p224 = por %p222, %p223
      %s225 = ssub.s32 %s23, %s30
      %p226 = scmp.eq.s32.totalorder %s225, 0
      %s228 = sadd.s32 %s227, 1
      %s229 = scalar_select %p226, %s227, %s228
      %p232 = pneg %p226
      %p233 = scmp.eq.s32.totalorder %s23, 7
      %p234 = por %p232, %p233
      %p235 = scmp.ne.s32.totalorder %s227, %s230
      %p236 = scmp.eq.s32.totalorder %s23, 0
      %p237 = por %p235, %p236
      %p238 = scmp.ne.s32.totalorder %s227, %s230
      %p239 = scmp.eq.s32.totalorder %s28, 7
      %p240 = por %p238, %p239
      %p241 = scmp.ne.s32.totalorder %s230, %s231
      %p242 = scmp.eq.s32.totalorder %s28, 0
      %p243 = por %p241, %p242
      %p244 = scmp.ne.s32.totalorder %s230, %s231
      %p245 = scmp.eq.s32.totalorder %s29, 7
      %p246 = por %p244, %p245
      %p248 = scmp.ne.s32.totalorder %s231, %s247
      %p249 = scmp.eq.s32.totalorder %s29, 0
      %p250 = por %p248, %p249
      %s251 = ssub.s32 %s23, %s30
      %p252 = scmp.eq.s32.totalorder %s251, 0
      %s254 = sadd.s32 %s253, 1
      %s255 = scalar_select %p252, %s253, %s254
      %p258 = pneg %p252
      %p259 = scmp.eq.s32.totalorder %s23, 7
      %p260 = por %p258, %p259
      %p261 = scmp.ne.s32.totalorder %s253, %s256
      %p262 = scmp.eq.s32.totalorder %s23, 0
      %p263 = por %p261, %p262
      %p264 = scmp.ne.s32.totalorder %s253, %s256
      %p265 = scmp.eq.s32.totalorder %s28, 7
      %p266 = por %p264, %p265
      %p267 = scmp.ne.s32.totalorder %s256, %s257
      %p268 = scmp.eq.s32.totalorder %s28, 0
      %p269 = por %p267, %p268
      %p270 = scmp.ne.s32.totalorder %s256, %s257
      %p271 = scmp.eq.s32.totalorder %s29, 7
      %p272 = por %p270, %p271
      %p274 = scmp.ne.s32.totalorder %s257, %s273
      %p275 = scmp.eq.s32.totalorder %s29, 0
      %p276 = por %p274, %p275
      %p277 = scmp.le.s32.totalorder 1, %s23
      %p278 = scmp.lt.s32.totalorder %s23, 9
      %p279 = pnand %p277, %p278
      %p280 = pneg %p279
      // Predicated region
      $region9: #{kron_mlp_decoder_batched.1} parent=5 // pred_check
        _
      $region10: #{kron_mlp_decoder_batched.1} parent=5 // pred_check_branch
        %282 = sbr.rel (%p279) target = $region12
      $region11: #{kron_mlp_decoder_batched.1} parent=5 // pred_region
        %s283 = ssub.s32 %s23, 1
        // Predicated region
        $region13: #{kron_mlp_decoder_batched.1} parent=11 // pred_check
          %p284 = pneg %p70
        $region14: #{kron_mlp_decoder_batched.1} parent=11 // pred_check_branch
          %286 = sbr.rel (%p284) target = $region16
        $region15: #{kron_mlp_decoder_batched.1} parent=11 // pred_region
          _
        $region16: #{kron_mlp_decoder_batched.1} parent=11 // pred_fallthru
          _
        // Predicated region
        $region17: #{kron_mlp_decoder_batched.1} parent=11 // pred_check
          %p287 = pneg %p91
        $region18: #{kron_mlp_decoder_batched.1} parent=11 // pred_check_branch
          %289 = sbr.rel (%p287) target = $region20
        $region19: #{kron_mlp_decoder_batched.1} parent=11 // pred_region
          %s291 = ssub.s32 512, 512
          %292 = vsyncadd [#allocation5], %s291
          %s293 = sshll.u32 [#allocation4], 4
          %s294 = int_to_ptr.vmem [resolvable:$true] %s293
          %299 = dma.hbm_to_vmem [thread:$0]  %s2, 512, %s294, [#allocation5], 64, 64, 4
        $region20: #{kron_mlp_decoder_batched.1} parent=11 // pred_fallthru
          _
        // Predicated region
        $region21: #{kron_mlp_decoder_batched.1} parent=11 // pred_check
          %p300 = pneg %p112
        $region22: #{kron_mlp_decoder_batched.1} parent=11 // pred_check_branch
          %302 = sbr.rel (%p300) target = $region24
        $region23: #{kron_mlp_decoder_batched.1} parent=11 // pred_region
          %s304 = ssub.s32 64, 64
          %305 = vsyncadd [#allocation5], %s304
          %s307 = sshll.u32 [#allocation6], 4
          %s308 = int_to_ptr.vmem [resolvable:$true] %s307
          %310 = dma.hbm_to_vmem [thread:$0]  %s3, 64, %s308, [#allocation5]
        $region24: #{kron_mlp_decoder_batched.1} parent=11 // pred_fallthru
          _
        // Predicated region
        $region25: #{kron_mlp_decoder_batched.1} parent=11 // pred_check
          %p311 = pneg %p133
        $region26: #{kron_mlp_decoder_batched.1} parent=11 // pred_check_branch
          %313 = sbr.rel (%p311) target = $region28
        $region27: #{kron_mlp_decoder_batched.1} parent=11 // pred_region
          _
        $region28: #{kron_mlp_decoder_batched.1} parent=11 // pred_fallthru
          _
        // Predicated region
        $region29: #{kron_mlp_decoder_batched.1} parent=11 // pred_check
          %p314 = pneg %p154
        $region30: #{kron_mlp_decoder_batched.1} parent=11 // pred_check_branch
          %316 = sbr.rel (%p314) target = $region32
        $region31: #{kron_mlp_decoder_batched.1} parent=11 // pred_region
          _
        $region32: #{kron_mlp_decoder_batched.1} parent=11 // pred_fallthru
          _
        // Predicated region
        $region33: #{kron_mlp_decoder_batched.1} parent=11 // pred_check
          %p317 = pneg %p175
        $region34: #{kron_mlp_decoder_batched.1} parent=11 // pred_check_branch
          %319 = sbr.rel (%p317) target = $region36
        $region35: #{kron_mlp_decoder_batched.1} parent=11 // pred_region
          %s321 = ssub.s32 4096, 4096
          %322 = vsyncadd [#allocation8], %s321
          %s323 = sshll.u32 [#allocation7], 4
          %s324 = int_to_ptr.vmem [resolvable:$true] %s323
          %329 = dma.hbm_to_vmem [thread:$0]  %s6, 4096, %s324, [#allocation8], 256, 256, 16
        $region36: #{kron_mlp_decoder_batched.1} parent=11 // pred_fallthru
          _
        // Predicated region
        $region37: #{kron_mlp_decoder_batched.1} parent=11 // pred_check
          %p330 = pneg %p196
        $region38: #{kron_mlp_decoder_batched.1} parent=11 // pred_check_branch
          %332 = sbr.rel (%p330) target = $region40
        $region39: #{kron_mlp_decoder_batched.1} parent=11 // pred_region
          %s334 = ssub.s32 512, 512
          %335 = vsyncadd [#allocation8], %s334
          %s336 = sshll.u32 [#allocation9], 4
          %s337 = int_to_ptr.vmem [resolvable:$true] %s336
          %342 = dma.hbm_to_vmem [thread:$0]  %s7, 512, %s337, [#allocation8], 128, 128, 8
        $region40: #{kron_mlp_decoder_batched.1} parent=11 // pred_fallthru
          _
        // Predicated region
        $region41: #{kron_mlp_decoder_batched.1} parent=11 // pred_check
          %p343 = pneg %p217
        $region42: #{kron_mlp_decoder_batched.1} parent=11 // pred_check_branch
          %345 = sbr.rel (%p343) target = $region44
        $region43: #{kron_mlp_decoder_batched.1} parent=11 // pred_region
          %s347 = ssub.s32 512, 512
          %348 = vsyncadd [#allocation11], %s347
          %s349 = sshll.u32 [#allocation10], 4
          %s350 = int_to_ptr.vmem [resolvable:$true] %s349
          %355 = dma.hbm_to_vmem [thread:$0]  %s8, 512, %s350, [#allocation11], 128, 128, 8
        $region44: #{kron_mlp_decoder_batched.1} parent=11 // pred_fallthru
          _
      $region12: #{kron_mlp_decoder_batched.1} parent=5 // pred_fallthru
        _
      %p356 = scmp.lt.s32.totalorder %s23, 8
      // Predicated region
      $region45: #{kron_mlp_decoder_batched.1} parent=5 // pred_check
        %p357 = pneg %p356
      $region46: #{kron_mlp_decoder_batched.1} parent=5 // pred_check_branch
        %359 = sbr.rel (%p357) target = $region48
      $region47: #{kron_mlp_decoder_batched.1} parent=5 // pred_region
        // Predicated region
        $region49: #{kron_mlp_decoder_batched.1} parent=47 // pred_check
          %p360 = pneg %p43
        $region50: #{kron_mlp_decoder_batched.1} parent=47 // pred_check_branch
          %362 = sbr.rel (%p360) target = $region52
        $region51: #{kron_mlp_decoder_batched.1} parent=47 // pred_region
          %s363 = sand.u32 %s33, 1
          %s364 = scalar_lea.sflag [#allocation3], %s363
          %s365 = sand.u32 %s33, 1
          %s366 = smul.addr %s365, 2
          %s367 = scalar_lea.vmem [#allocation2], %s366
          %s369 = ssub.s32 32, 32
          %370 = vsyncadd %s364, %s369
          %s371 = smul.addr %s23, 32
          %s372 = scalar_lea.hbm %s0, %s371
          %s374 = sshll.u32 %s367, 4
          %s375 = int_to_ptr.vmem [resolvable:$true] %s374
          %377 = dma.hbm_to_vmem [thread:$0]  %s372, 32, %s375, %s364
        $region52: #{kron_mlp_decoder_batched.1} parent=47 // pred_fallthru
          _
      $region48: #{kron_mlp_decoder_batched.1} parent=5 // pred_fallthru
        _
      %p378 = scmp.le.s32.totalorder 1, %s23
      %p379 = scmp.lt.s32.totalorder %s23, 9
      %p380 = pnand %p378, %p379
      %p381 = pneg %p380
      // Predicated region
      $region53: #{kron_mlp_decoder_batched.1} parent=5 // pred_check
        _
      $region54: #{kron_mlp_decoder_batched.1} parent=5 // pred_check_branch
        %383 = sbr.rel (%p380) target = $region56
      $region55: #{kron_mlp_decoder_batched.1} parent=5 // pred_region
        %s384 = ssub.s32 %s23, 1
        %s385 = sand.u32 %s36, 1
        %s386 = scalar_lea.sflag [#allocation3], %s385
        %s387 = sand.u32 %s36, 1
        %s388 = smul.addr %s387, 2
        %s389 = scalar_lea.vmem [#allocation2], %s388
        // Predicated region
        $region57: #{kron_mlp_decoder_batched.1} parent=55 // pred_check
          %p390 = pneg %p49
        $region58: #{kron_mlp_decoder_batched.1} parent=55 // pred_check_branch
          %392 = sbr.rel (%p390) target = $region60
        $region59: #{kron_mlp_decoder_batched.1} parent=55 // pred_region
          %393 = dma.done %s386, 32
        $region60: #{kron_mlp_decoder_batched.1} parent=55 // pred_fallthru
          _
        // Predicated region
        $region61: #{kron_mlp_decoder_batched.1} parent=55 // pred_check
          %p394 = pneg %p91
        $region62: #{kron_mlp_decoder_batched.1} parent=55 // pred_check_branch
          %396 = sbr.rel (%p394) target = $region64
        $region63: #{kron_mlp_decoder_batched.1} parent=55 // pred_region
          %397 = dma.done [#allocation5], 512
        $region64: #{kron_mlp_decoder_batched.1} parent=55 // pred_fallthru
          _
        // Predicated region
        $region65: #{kron_mlp_decoder_batched.1} parent=55 // pred_check
          %p398 = pneg %p112
        $region66: #{kron_mlp_decoder_batched.1} parent=55 // pred_check_branch
          %400 = sbr.rel (%p398) target = $region68
        $region67: #{kron_mlp_decoder_batched.1} parent=55 // pred_region
          %401 = dma.done [#allocation5], 64
        $region68: #{kron_mlp_decoder_batched.1} parent=55 // pred_fallthru
          _
        // Predicated region
        $region69: #{kron_mlp_decoder_batched.1} parent=55 // pred_check
          %p402 = pneg %p175
        $region70: #{kron_mlp_decoder_batched.1} parent=55 // pred_check_branch
          %404 = sbr.rel (%p402) target = $region72
        $region71: #{kron_mlp_decoder_batched.1} parent=55 // pred_region
          %405 = dma.done [#allocation8], 4096
        $region72: #{kron_mlp_decoder_batched.1} parent=55 // pred_fallthru
          _
        // Predicated region
        $region73: #{kron_mlp_decoder_batched.1} parent=55 // pred_check
          %p406 = pneg %p196
        $region74: #{kron_mlp_decoder_batched.1} parent=55 // pred_check_branch
          %408 = sbr.rel (%p406) target = $region76
        $region75: #{kron_mlp_decoder_batched.1} parent=55 // pred_region
          %409 = dma.done [#allocation8], 512
        $region76: #{kron_mlp_decoder_batched.1} parent=55 // pred_fallthru
          _
        // Predicated region
        $region77: #{kron_mlp_decoder_batched.1} parent=55 // pred_check
          %p410 = pneg %p217
        $region78: #{kron_mlp_decoder_batched.1} parent=55 // pred_check_branch
          %412 = sbr.rel (%p410) target = $region80
        $region79: #{kron_mlp_decoder_batched.1} parent=55 // pred_region
          %413 = dma.done [#allocation11], 512
        $region80: #{kron_mlp_decoder_batched.1} parent=55 // pred_fallthru
          _
        %s414 = sand.u32 %s36, 1
        %s415 = scalar_lea.sflag [#allocation3], %s414
        %s416 = sand.u32 %s36, 1
        %s417 = smul.addr %s416, 2
        %s418 = scalar_lea.vmem [#allocation2], %s417
        %p419 = pneg %p49
        %p420 = pneg %p46
        %p421 = pneg %p70
        %p422 = pneg %p67
        %p423 = pneg %p91
        %p424 = pneg %p88
        %p425 = pneg %p112
        %p426 = pneg %p109
        %p427 = pneg %p133
        %p428 = pneg %p130
        %p429 = pneg %p154
        %p430 = pneg %p151
        %p431 = pneg %p175
        %p432 = pneg %p172
        %p433 = pneg %p196
        %p434 = pneg %p193
        %p435 = pneg %p217
        %p436 = pneg %p214
        %p437 = pneg %p243
        %p438 = pneg %p240
        %p439 = scmp.lt.s32.totalorder %s28, 7
        %s440 = scalar_select %p439, %s28, 7
        %s441 = smul.addr %s440, 8
        %s442 = smul.addr %s441, 8
        %s443 = scalar_lea.vmem %s9, %s442
        %p444 = pneg %p269
        %p445 = pneg %p266
        %p446 = scmp.lt.s32.totalorder %s28, 7
        %s447 = scalar_select %p446, %s28, 7
        %s448 = smul.addr %s447, 8
        %s449 = smul.addr %s448, 8
        %s450 = scalar_lea.vmem %s10, %s449
        %p451 = scmp.lt.s32.totalorder %s28, 7
        %s452 = scalar_select %p451, %s28, 7
        %s453 = smul.addr %s452, 8
        %s454 = smul.addr %s453, 8
        %s455 = scalar_lea.vmem %s9, %s454
        %p456 = scmp.lt.s32.totalorder %s28, 7
        %s457 = scalar_select %p456, %s28, 7
        %s458 = smul.addr %s457, 8
        %s459 = smul.addr %s458, 8
        %s460 = scalar_lea.vmem %s10, %s459
        %v462 = vld [vmem:[%s389] sm:$0x3]
        %v463 = vmax.f32 %v462, 0.0
        %v464 = vpack.c.bf16 %v463, %v463
        %v465 = vld [vmem:[#allocation4] sm:$0xf]
        %v466 = vld [vmem:[#allocation4 + $0x4] sm:$0xf]
        %v467 = vld [vmem:[#allocation4 + $0x8] sm:$0xf]
        %v468 = vld [vmem:[#allocation4 + $0xc] sm:$0xf]
        %v469 = vld [vmem:[#allocation4 + $0x10] sm:$0xf]
        %v470 = vld [vmem:[#allocation4 + $0x14] sm:$0xf]
        %v471 = vld [vmem:[#allocation4 + $0x18] sm:$0xf]
        %v472 = vld [vmem:[#allocation4 + $0x1c] sm:$0xf]
        %v481 = vunpack.c.l.b16 %v465
        %v482 = vunpack.c.l.b16 %v466
        %v483 = vunpack.c.l.b16 %v467
        %v484 = vunpack.c.l.b16 %v468
        %v485 = vunpack.c.l.b16 %v469
        %v486 = vunpack.c.l.b16 %v470
        %v487 = vunpack.c.l.b16 %v471
        %v488 = vunpack.c.l.b16 %v472
        %v489 = vpack.c.b16 %v482, %v481
        %v490 = vpack.c.b16 %v484, %v483
        %v491 = vpack.c.b16 %v486, %v485
        %v492 = vpack.c.b16 %v488, %v487
        %vm497 = vcmask 523264
        %v499 = vsel %vm497, %v464, 0
        %501 = vmatprep.subr.bf16.mxu0 0
        %502 = vmatpush1.bf16.msra.mxu0 0
        %503 = vmatprep.subr.bf16.mxu0 0
        %504 = vmatpush1.bf16.msra.mxu0 0
        %505 = vmatprep.subr.bf16.mxu0 0
        %506 = vmatpush1.bf16.msra.mxu0 0
        %507 = vmatprep.subr.bf16.mxu0 0
        %508 = vmatpush1.bf16.msra.mxu0 0
        %509 = vmatprep.subr.bf16.mxu0 0
        %510 = vmatpush1.bf16.msra.mxu0 %v492
        %511 = vmatprep.subr.bf16.mxu0 0
        %512 = vmatpush1.bf16.msra.mxu0 %v491
        %513 = vmatprep.subr.bf16.mxu0 0
        %514 = vmatpush1.bf16.msra.mxu0 %v490
        %515 = vmatprep.subr.bf16.mxu0 0
        %516 = vmatpush1.bf16.msra.mxu0 %v489
        %517 = vmatprep.subr.bf16.mxu0 0
        %518 = vmatpush2.bf16.msra.mxu0 0
        %519 = vmatprep.subr.bf16.mxu0 0
        %520 = vmatpush2.bf16.msra.mxu0 0
        %521 = vmatprep.subr.bf16.mxu0 0
        %522 = vmatpush2.bf16.msra.mxu0 0
        %523 = vmatprep.subr.bf16.mxu0 0
        %524 = vmatpush2.bf16.msra.mxu0 0
        %525 = vmatprep.subr.bf16.mxu0 0
        %526 = vmatpush2.bf16.msra.mxu0 0
        %527 = vmatprep.subr.bf16.mxu0 0
        %528 = vmatpush2.bf16.msra.mxu0 0
        %529 = vmatprep.subr.bf16.mxu0 0
        %530 = vmatpush2.bf16.msra.mxu0 0
        %531 = vmatprep.subr.bf16.mxu0 0
        %532 = vmatpush2.bf16.msra.mxu0 0
        %533 = vmatprep.mubr.bf16.mxu0 0
        %534 = vmatmul.mubr.bf16.gmra.mxu0 %v499
        %v535 = vpop.f32.mrf.mxu0
        %v536 = vadd.f32 0.0, %v535
        %v537 = vpop.f32.mrf.mxu0
        %v538 = vpop.f32.mrf.mxu0
        %v539 = vpop.f32.mrf.mxu0
        %540 = vdwg.mxu0
        %v541 = vld [vmem:[%s1] sm:$0xff]
        %543 = vset.pattern.permute.xlu0 0
        %544 = vperm.xlu0 %543, %v541
        %v545 = vpop.permute.xlu0 %544
        %v547 = vlaneseq
        %v548 = vshrl.u32 %v547, 7
        %v549 = vsub.s32 0, %v548
        %v550 = vrot.slane %v536, %v549
        %v551 = vmul.f32 %v545, %v550
        %552 = vset.pattern.permute.xlu0 1
        %553 = vperm.xlu0 %552, %v541
        %v554 = vpop.permute.xlu0 %553
        %v556 = vlaneseq
        %v557 = vshrl.u32 %v556, 7
        %v558 = vsub.s32 1, %v557
        %v559 = vrot.slane %v536, %v558
        %v560 = vmul.f32 %v554, %v559
        %v561 = vadd.f32 %v551, %v560
        %v562 = vld [vmem:[#allocation6] sm:$0xf]
        %v563 = vunpack.c.l.bf16 %v562
        %v564 = vadd.f32 %v561, %v563
        %v565 = vmax.f32 %v564, 0.0
        %v566 = vpack.c.bf16 %v565, %v565
        %v567 = vld [vmem:[#allocation7] sm:$0xff]
        %v568 = vld [vmem:[#allocation7 + $0x8] sm:$0xff]
        %v569 = vld [vmem:[#allocation7 + $0x10] sm:$0xff]
        %v570 = vld [vmem:[#allocation7 + $0x18] sm:$0xff]
        %v571 = vld [vmem:[#allocation7 + $0x20] sm:$0xff]
        %v572 = vld [vmem:[#allocation7 + $0x28] sm:$0xff]
        %v573 = vld [vmem:[#allocation7 + $0x30] sm:$0xff]
        %v574 = vld [vmem:[#allocation7 + $0x38] sm:$0xff]
        %v575 = vld [vmem:[#allocation7 + $0x40] sm:$0xff]
        %v576 = vld [vmem:[#allocation7 + $0x48] sm:$0xff]
        %v577 = vld [vmem:[#allocation7 + $0x50] sm:$0xff]
        %v578 = vld [vmem:[#allocation7 + $0x58] sm:$0xff]
        %v579 = vld [vmem:[#allocation7 + $0x60] sm:$0xff]
        %v580 = vld [vmem:[#allocation7 + $0x68] sm:$0xff]
        %v581 = vld [vmem:[#allocation7 + $0x70] sm:$0xff]
        %v582 = vld [vmem:[#allocation7 + $0x78] sm:$0xff]
        %v583 = vld [vmem:[#allocation7 + $0x80] sm:$0xff]
        %v584 = vld [vmem:[#allocation7 + $0x88] sm:$0xff]
        %v585 = vld [vmem:[#allocation7 + $0x90] sm:$0xff]
        %v586 = vld [vmem:[#allocation7 + $0x98] sm:$0xff]
        %v587 = vld [vmem:[#allocation7 + $0xa0] sm:$0xff]
        %v588 = vld [vmem:[#allocation7 + $0xa8] sm:$0xff]
        %v589 = vld [vmem:[#allocation7 + $0xb0] sm:$0xff]
        %v590 = vld [vmem:[#allocation7 + $0xb8] sm:$0xff]
        %v591 = vld [vmem:[#allocation7 + $0xc0] sm:$0xff]
        %v592 = vld [vmem:[#allocation7 + $0xc8] sm:$0xff]
        %v593 = vld [vmem:[#allocation7 + $0xd0] sm:$0xff]
        %v594 = vld [vmem:[#allocation7 + $0xd8] sm:$0xff]
        %v595 = vld [vmem:[#allocation7 + $0xe0] sm:$0xff]
        %v596 = vld [vmem:[#allocation7 + $0xe8] sm:$0xff]
        %v597 = vld [vmem:[#allocation7 + $0xf0] sm:$0xff]
        %v598 = vld [vmem:[#allocation7 + $0xf8] sm:$0xff]
        %v631 = vunpack.c.l.b16 %v567
        %v632 = vunpack.c.h.b16 %v567
        %v633 = vunpack.c.l.b16 %v568
        %v634 = vunpack.c.h.b16 %v568
        %v635 = vunpack.c.l.b16 %v569
        %v636 = vunpack.c.h.b16 %v569
        %v637 = vunpack.c.l.b16 %v570
        %v638 = vunpack.c.h.b16 %v570
        %v639 = vunpack.c.l.b16 %v571
        %v640 = vunpack.c.h.b16 %v571
        %v641 = vunpack.c.l.b16 %v572
        %v642 = vunpack.c.h.b16 %v572
        %v643 = vunpack.c.l.b16 %v573
        %v644 = vunpack.c.h.b16 %v573
        %v645 = vunpack.c.l.b16 %v574
        %v646 = vunpack.c.h.b16 %v574
        %v647 = vunpack.c.l.b16 %v575
        %v648 = vunpack.c.h.b16 %v575
        %v649 = vunpack.c.l.b16 %v576
        %v650 = vunpack.c.h.b16 %v576
        %v651 = vunpack.c.l.b16 %v577
        %v652 = vunpack.c.h.b16 %v577
        %v653 = vunpack.c.l.b16 %v578
        %v654 = vunpack.c.h.b16 %v578
        %v655 = vunpack.c.l.b16 %v579
        %v656 = vunpack.c.h.b16 %v579
        %v657 = vunpack.c.l.b16 %v580
        %v658 = vunpack.c.h.b16 %v580
        %v659 = vunpack.c.l.b16 %v581
        %v660 = vunpack.c.h.b16 %v581
        %v661 = vunpack.c.l.b16 %v582
        %v662 = vunpack.c.h.b16 %v582
        %v663 = vunpack.c.l.b16 %v583
        %v664 = vunpack.c.h.b16 %v583
        %v665 = vunpack.c.l.b16 %v584
        %v666 = vunpack.c.h.b16 %v584
        %v667 = vunpack.c.l.b16 %v585
        %v668 = vunpack.c.h.b16 %v585
        %v669 = vunpack.c.l.b16 %v586
        %v670 = vunpack.c.h.b16 %v586
        %v671 = vunpack.c.l.b16 %v587
        %v672 = vunpack.c.h.b16 %v587
        %v673 = vunpack.c.l.b16 %v588
        %v674 = vunpack.c.h.b16 %v588
        %v675 = vunpack.c.l.b16 %v589
        %v676 = vunpack.c.h.b16 %v589
        %v677 = vunpack.c.l.b16 %v590
        %v678 = vunpack.c.h.b16 %v590
        %v679 = vunpack.c.l.b16 %v591
        %v680 = vunpack.c.h.b16 %v591
        %v681 = vunpack.c.l.b16 %v592
        %v682 = vunpack.c.h.b16 %v592
        %v683 = vunpack.c.l.b16 %v593
        %v684 = vunpack.c.h.b16 %v593
        %v685 = vunpack.c.l.b16 %v594
        %v686 = vunpack.c.h.b16 %v594
        %v687 = vunpack.c.l.b16 %v595
        %v688 = vunpack.c.h.b16 %v595
        %v689 = vunpack.c.l.b16 %v596
        %v690 = vunpack.c.h.b16 %v596
        %v691 = vunpack.c.l.b16 %v597
        %v692 = vunpack.c.h.b16 %v597
        %v693 = vunpack.c.l.b16 %v598
        %v694 = vunpack.c.h.b16 %v598
        %v695 = vpack.c.b16 %v635, %v631
        %v696 = vpack.c.b16 %v636, %v632
        %v697 = vpack.c.b16 %v637, %v633
        %v698 = vpack.c.b16 %v638, %v634
        %v699 = vpack.c.b16 %v643, %v639
        %v700 = vpack.c.b16 %v644, %v640
        %v701 = vpack.c.b16 %v645, %v641
        %v702 = vpack.c.b16 %v646, %v642
        %v703 = vpack.c.b16 %v651, %v647
        %v704 = vpack.c.b16 %v652, %v648
        %v705 = vpack.c.b16 %v653, %v649
        %v706 = vpack.c.b16 %v654, %v650
        %v707 = vpack.c.b16 %v659, %v655
        %v708 = vpack.c.b16 %v660, %v656
        %v709 = vpack.c.b16 %v661, %v657
        %v710 = vpack.c.b16 %v662, %v658
        %v711 = vpack.c.b16 %v667, %v663
        %v712 = vpack.c.b16 %v668, %v664
        %v713 = vpack.c.b16 %v669, %v665
        %v714 = vpack.c.b16 %v670, %v666
        %v715 = vpack.c.b16 %v675, %v671
        %v716 = vpack.c.b16 %v676, %v672
        %v717 = vpack.c.b16 %v677, %v673
        %v718 = vpack.c.b16 %v678, %v674
        %v719 = vpack.c.b16 %v683, %v679
        %v720 = vpack.c.b16 %v684, %v680
        %v721 = vpack.c.b16 %v685, %v681
        %v722 = vpack.c.b16 %v686, %v682
        %v723 = vpack.c.b16 %v691, %v687
        %v724 = vpack.c.b16 %v692, %v688
        %v725 = vpack.c.b16 %v693, %v689
        %v726 = vpack.c.b16 %v694, %v690
        %759 = vmatprep.subr.bf16.mxu0 %v724
        %760 = vmatpush1.bf16.msra.mxu0 %v723
        %761 = vmatprep.subr.bf16.mxu0 %v720
        %762 = vmatpush1.bf16.msra.mxu0 %v719
        %763 = vmatprep.subr.bf16.mxu0 %v716
        %764 = vmatpush1.bf16.msra.mxu0 %v715
        %765 = vmatprep.subr.bf16.mxu0 %v712
        %766 = vmatpush1.bf16.msra.mxu0 %v711
        %767 = vmatprep.subr.bf16.mxu0 %v708
        %768 = vmatpush1.bf16.msra.mxu0 %v707
        %769 = vmatprep.subr.bf16.mxu0 %v704
        %770 = vmatpush1.bf16.msra.mxu0 %v703
        %771 = vmatprep.subr.bf16.mxu0 %v700
        %772 = vmatpush1.bf16.msra.mxu0 %v699
        %773 = vmatprep.subr.bf16.mxu0 %v696
        %774 = vmatpush1.bf16.msra.mxu0 %v695
        %775 = vmatprep.subr.bf16.mxu0 0
        %776 = vmatpush2.bf16.msra.mxu0 0
        %777 = vmatprep.subr.bf16.mxu0 0
        %778 = vmatpush2.bf16.msra.mxu0 0
        %779 = vmatprep.subr.bf16.mxu0 0
        %780 = vmatpush2.bf16.msra.mxu0 0
        %781 = vmatprep.subr.bf16.mxu0 0
        %782 = vmatpush2.bf16.msra.mxu0 0
        %783 = vmatprep.subr.bf16.mxu0 0
        %784 = vmatpush2.bf16.msra.mxu0 0
        %785 = vmatprep.subr.bf16.mxu0 0
        %786 = vmatpush2.bf16.msra.mxu0 0
        %787 = vmatprep.subr.bf16.mxu0 0
        %788 = vmatpush2.bf16.msra.mxu0 0
        %789 = vmatprep.subr.bf16.mxu0 0
        %790 = vmatpush2.bf16.msra.mxu0 0
        %791 = vmatprep.mubr.bf16.mxu0 0
        %792 = vmatmul.mubr.bf16.gmra.mxu0 %v566
        %v793 = vpop.f32.mrf.mxu0
        %v794 = vadd.f32 0.0, %v793
        %v795 = vpop.f32.mrf.mxu0
        %v796 = vadd.f32 0.0, %v795
        %v797 = vpop.f32.mrf.mxu0
        %v798 = vpop.f32.mrf.mxu0
        %799 = vdwg.mxu0
        %800 = vmatprep.subr.bf16.mxu0 %v726
        %801 = vmatpush1.bf16.msra.mxu0 %v725
        %802 = vmatprep.subr.bf16.mxu0 %v722
        %803 = vmatpush1.bf16.msra.mxu0 %v721
        %804 = vmatprep.subr.bf16.mxu0 %v718
        %805 = vmatpush1.bf16.msra.mxu0 %v717
        %806 = vmatprep.subr.bf16.mxu0 %v714
        %807 = vmatpush1.bf16.msra.mxu0 %v713
        %808 = vmatprep.subr.bf16.mxu0 %v710
        %809 = vmatpush1.bf16.msra.mxu0 %v709
        %810 = vmatprep.subr.bf16.mxu0 %v706
        %811 = vmatpush1.bf16.msra.mxu0 %v705
        %812 = vmatprep.subr.bf16.mxu0 %v702
        %813 = vmatpush1.bf16.msra.mxu0 %v701
        %814 = vmatprep.subr.bf16.mxu0 %v698
        %815 = vmatpush1.bf16.msra.mxu0 %v697
        %816 = vmatprep.subr.bf16.mxu0 0
        %817 = vmatpush2.bf16.msra.mxu0 0
        %818 = vmatprep.subr.bf16.mxu0 0
        %819 = vmatpush2.bf16.msra.mxu0 0
        %820 = vmatprep.subr.bf16.mxu0 0
        %821 = vmatpush2.bf16.msra.mxu0 0
        %822 = vmatprep.subr.bf16.mxu0 0
        %823 = vmatpush2.bf16.msra.mxu0 0
        %824 = vmatprep.subr.bf16.mxu0 0
        %825 = vmatpush2.bf16.msra.mxu0 0
        %826 = vmatprep.subr.bf16.mxu0 0
        %827 = vmatpush2.bf16.msra.mxu0 0
        %828 = vmatprep.subr.bf16.mxu0 0
        %829 = vmatpush2.bf16.msra.mxu0 0
        %830 = vmatprep.subr.bf16.mxu0 0
        %831 = vmatpush2.bf16.msra.mxu0 0
        %832 = vmatprep.mubr.bf16.mxu0 0
        %833 = vmatmul.mubr.bf16.gmra.mxu0 %v566
        %v834 = vpop.f32.mrf.mxu0
        %v835 = vadd.f32 0.0, %v834
        %v836 = vpop.f32.mrf.mxu0
        %v837 = vadd.f32 0.0, %v836
        %v838 = vpop.f32.mrf.mxu0
        %v839 = vpop.f32.mrf.mxu0
        %840 = vdwg.mxu0
        %v841 = vld [vmem:[%s4] sm:$0xff]
        %v842 = vld [vmem:[%s4 + $0x8] sm:$0xff]
        %v843 = vld [vmem:[%s4 + $0x10] sm:$0xff]
        %v844 = vld [vmem:[%s4 + $0x18] sm:$0xff]
        %v845 = vld [vmem:[#allocation9] sm:$0xff]
        %v846 = vld [vmem:[#allocation9 + $0x8] sm:$0xff]
        %v847 = vld [vmem:[#allocation9 + $0x10] sm:$0xff]
        %v848 = vld [vmem:[#allocation9 + $0x18] sm:$0xff]
        %v849 = vunpack.c.l.bf16 %v845
        %v850 = vunpack.c.h.bf16 %v845
        %v851 = vunpack.c.l.bf16 %v846
        %v852 = vunpack.c.h.bf16 %v846
        %v853 = vunpack.c.l.bf16 %v847
        %v854 = vunpack.c.h.bf16 %v847
        %v855 = vunpack.c.l.bf16 %v848
        %v856 = vunpack.c.h.bf16 %v848
        %vm857 = vcmask 64512
        %v859 = vsel %vm857, %v841, 0
        %v862 = vsel %vm857, %v842, 0
        %v865 = vsel %vm857, %v843, 0
        %v868 = vsel %vm857, %v844, 0
        %870 = vmatprep.subr.mxu0 0.0
        %871 = vmatpush1.msra.mxu0 0.0
        %872 = vmatprep.subr.mxu0 0.0
        %873 = vmatpush1.msra.mxu0 0.0
        %874 = vmatprep.subr.mxu0 0.0
        %875 = vmatpush1.msra.mxu0 0.0
        %876 = vmatprep.subr.mxu0 0.0
        %877 = vmatpush1.msra.mxu0 0.0
        %878 = vmatprep.subr.mxu0 0.0
        %879 = vmatpush1.msra.mxu0 0.0
        %880 = vmatprep.subr.mxu0 0.0
        %881 = vmatpush1.msra.mxu0 0.0
        %882 = vmatprep.subr.mxu0 0.0
        %883 = vmatpush1.msra.mxu0 0.0
        %884 = vmatprep.subr.mxu0 0.0
        %885 = vmatpush1.msra.mxu0 0.0
        %886 = vmatprep.subr.mxu0 0.0
        %887 = vmatpush1.msra.mxu0 0.0
        %888 = vmatprep.subr.mxu0 0.0
        %889 = vmatpush1.msra.mxu0 0.0
        %890 = vmatprep.subr.mxu0 0.0
        %891 = vmatpush1.msra.mxu0 0.0
        %892 = vmatprep.subr.mxu0 0.0
        %893 = vmatpush1.msra.mxu0 0.0
        %894 = vmatprep.subr.mxu0 0.0
        %895 = vmatpush1.msra.mxu0 0.0
        %896 = vmatprep.subr.mxu0 0.0
        %897 = vmatpush1.msra.mxu0 0.0
        %898 = vmatprep.subr.mxu0 0.0
        %899 = vmatpush1.msra.mxu0 0.0
        %900 = vmatprep.subr.mxu0 %v796
        %901 = vmatpush1.msra.mxu0 %v794
        %902 = vmatprep.subr.mxu0 0.0
        %903 = vmatpush2.msra.mxu0 0.0
        %904 = vmatprep.subr.mxu0 0.0
        %905 = vmatpush2.msra.mxu0 0.0
        %906 = vmatprep.subr.mxu0 0.0
        %907 = vmatpush2.msra.mxu0 0.0
        %908 = vmatprep.subr.mxu0 0.0
        %909 = vmatpush2.msra.mxu0 0.0
        %910 = vmatprep.subr.mxu0 0.0
        %911 = vmatpush2.msra.mxu0 0.0
        %912 = vmatprep.subr.mxu0 0.0
        %913 = vmatpush2.msra.mxu0 0.0
        %914 = vmatprep.subr.mxu0 0.0
        %915 = vmatpush2.msra.mxu0 0.0
        %916 = vmatprep.subr.mxu0 0.0
        %917 = vmatpush2.msra.mxu0 0.0
        %918 = vmatprep.subr.mxu0 0.0
        %919 = vmatpush2.msra.mxu0 0.0
        %920 = vmatprep.subr.mxu0 0.0
        %921 = vmatpush2.msra.mxu0 0.0
        %922 = vmatprep.subr.mxu0 0.0
        %923 = vmatpush2.msra.mxu0 0.0
        %924 = vmatprep.subr.mxu0 0.0
        %925 = vmatpush2.msra.mxu0 0.0
        %926 = vmatprep.subr.mxu0 0.0
        %927 = vmatpush2.msra.mxu0 0.0
        %928 = vmatprep.subr.mxu0 0.0
        %929 = vmatpush2.msra.mxu0 0.0
        %930 = vmatprep.subr.mxu0 0.0
        %931 = vmatpush2.msra.mxu0 0.0
        %932 = vmatprep.subr.mxu0 0.0
        %933 = vmatpush2.msra.mxu0 0.0
        %934 = vmatprep.mubr.f32.mxu0 0.0
        %935 = vmatmul.mubr.f32.gmra.mxu0 %v859
        %v936 = vpop.f32.mrf.mxu0
        %v937 = vadd.f32 %v849, %v936
        %v938 = vpop.f32.mrf.mxu0
        %v939 = vadd.f32 %v850, %v938
        %940 = vmatprep.mubr.f32.mxu0 0.0
        %941 = vmatmul.mubr.f32.gmra.mxu0 %v862
        %v942 = vpop.f32.mrf.mxu0
        %v943 = vadd.f32 %v851, %v942
        %v944 = vpop.f32.mrf.mxu0
        %v945 = vadd.f32 %v852, %v944
        %946 = vmatprep.mubr.f32.mxu0 0.0
        %947 = vmatmul.mubr.f32.gmra.mxu0 %v865
        %v948 = vpop.f32.mrf.mxu0
        %v949 = vadd.f32 %v853, %v948
        %v950 = vpop.f32.mrf.mxu0
        %v951 = vadd.f32 %v854, %v950
        %952 = vmatprep.mubr.f32.mxu0 0.0
        %953 = vmatmul.mubr.f32.gmra.mxu0 %v868
        %v954 = vpop.f32.mrf.mxu0
        %v955 = vadd.f32 %v855, %v954
        %v956 = vpop.f32.mrf.mxu0
        %v957 = vadd.f32 %v856, %v956
        %958 = vdwg.mxu0
        %v959 = vld [vmem:[%s5] sm:$0xff]
        %v960 = vld [vmem:[%s5 + $0x8] sm:$0xff]
        %v961 = vld [vmem:[%s5 + $0x10] sm:$0xff]
        %v962 = vld [vmem:[%s5 + $0x18] sm:$0xff]
        %v963 = vld [vmem:[#allocation10] sm:$0xff]
        %v964 = vld [vmem:[#allocation10 + $0x8] sm:$0xff]
        %v965 = vld [vmem:[#allocation10 + $0x10] sm:$0xff]
        %v966 = vld [vmem:[#allocation10 + $0x18] sm:$0xff]
        %v967 = vunpack.c.l.bf16 %v963
        %v968 = vunpack.c.h.bf16 %v963
        %v969 = vunpack.c.l.bf16 %v964
        %v970 = vunpack.c.h.bf16 %v964
        %v971 = vunpack.c.l.bf16 %v965
        %v972 = vunpack.c.h.bf16 %v965
        %v973 = vunpack.c.l.bf16 %v966
        %v974 = vunpack.c.h.bf16 %v966
        %v976 = vsel %vm857, %v959, 0
        %v979 = vsel %vm857, %v960, 0
        %v982 = vsel %vm857, %v961, 0
        %v985 = vsel %vm857, %v962, 0
        %987 = vmatprep.subr.mxu0 0.0
        %988 = vmatpush1.msra.mxu0 0.0
        %989 = vmatprep.subr.mxu0 0.0
        %990 = vmatpush1.msra.mxu0 0.0
        %991 = vmatprep.subr.mxu0 0.0
        %992 = vmatpush1.msra.mxu0 0.0
        %993 = vmatprep.subr.mxu0 0.0
        %994 = vmatpush1.msra.mxu0 0.0
        %995 = vmatprep.subr.mxu0 0.0
        %996 = vmatpush1.msra.mxu0 0.0
        %997 = vmatprep.subr.mxu0 0.0
        %998 = vmatpush1.msra.mxu0 0.0
        %999 = vmatprep.subr.mxu0 0.0
        %1000 = vmatpush1.msra.mxu0 0.0
        %1001 = vmatprep.subr.mxu0 0.0
        %1002 = vmatpush1.msra.mxu0 0.0
        %1003 = vmatprep.subr.mxu0 0.0
        %1004 = vmatpush1.msra.mxu0 0.0
        %1005 = vmatprep.subr.mxu0 0.0
        %1006 = vmatpush1.msra.mxu0 0.0
        %1007 = vmatprep.subr.mxu0 0.0
        %1008 = vmatpush1.msra.mxu0 0.0
        %1009 = vmatprep.subr.mxu0 0.0
        %1010 = vmatpush1.msra.mxu0 0.0
        %1011 = vmatprep.subr.mxu0 0.0
        %1012 = vmatpush1.msra.mxu0 0.0
        %1013 = vmatprep.subr.mxu0 0.0
        %1014 = vmatpush1.msra.mxu0 0.0
        %1015 = vmatprep.subr.mxu0 0.0
        %1016 = vmatpush1.msra.mxu0 0.0
        %1017 = vmatprep.subr.mxu0 %v837
        %1018 = vmatpush1.msra.mxu0 %v835
        %1019 = vmatprep.subr.mxu0 0.0
        %1020 = vmatpush2.msra.mxu0 0.0
        %1021 = vmatprep.subr.mxu0 0.0
        %1022 = vmatpush2.msra.mxu0 0.0
        %1023 = vmatprep.subr.mxu0 0.0
        %1024 = vmatpush2.msra.mxu0 0.0
        %1025 = vmatprep.subr.mxu0 0.0
        %1026 = vmatpush2.msra.mxu0 0.0
        %1027 = vmatprep.subr.mxu0 0.0
        %1028 = vmatpush2.msra.mxu0 0.0
        %1029 = vmatprep.subr.mxu0 0.0
        %1030 = vmatpush2.msra.mxu0 0.0
        %1031 = vmatprep.subr.mxu0 0.0
        %1032 = vmatpush2.msra.mxu0 0.0
        %1033 = vmatprep.subr.mxu0 0.0
        %1034 = vmatpush2.msra.mxu0 0.0
        %1035 = vmatprep.subr.mxu0 0.0
        %1036 = vmatpush2.msra.mxu0 0.0
        %1037 = vmatprep.subr.mxu0 0.0
        %1038 = vmatpush2.msra.mxu0 0.0
        %1039 = vmatprep.subr.mxu0 0.0
        %1040 = vmatpush2.msra.mxu0 0.0
        %1041 = vmatprep.subr.mxu0 0.0
        %1042 = vmatpush2.msra.mxu0 0.0
        %1043 = vmatprep.subr.mxu0 0.0
        %1044 = vmatpush2.msra.mxu0 0.0
        %1045 = vmatprep.subr.mxu0 0.0
        %1046 = vmatpush2.msra.mxu0 0.0
        %1047 = vmatprep.subr.mxu0 0.0
        %1048 = vmatpush2.msra.mxu0 0.0
        %1049 = vmatprep.subr.mxu0 0.0
        %1050 = vmatpush2.msra.mxu0 0.0
        %1051 = vmatprep.mubr.f32.mxu0 0.0
        %1052 = vmatmul.mubr.f32.gmra.mxu0 %v976
        %v1053 = vpop.f32.mrf.mxu0
        %v1054 = vadd.f32 %v967, %v1053
        %v1055 = vpop.f32.mrf.mxu0
        %v1056 = vadd.f32 %v968, %v1055
        %1057 = vmatprep.mubr.f32.mxu0 0.0
        %1058 = vmatmul.mubr.f32.gmra.mxu0 %v979
        %v1059 = vpop.f32.mrf.mxu0
        %v1060 = vadd.f32 %v969, %v1059
        %v1061 = vpop.f32.mrf.mxu0
        %v1062 = vadd.f32 %v970, %v1061
        %1063 = vmatprep.mubr.f32.mxu0 0.0
        %1064 = vmatmul.mubr.f32.gmra.mxu0 %v982
        %v1065 = vpop.f32.mrf.mxu0
        %v1066 = vadd.f32 %v971, %v1065
        %v1067 = vpop.f32.mrf.mxu0
        %v1068 = vadd.f32 %v972, %v1067
        %1069 = vmatprep.mubr.f32.mxu0 0.0
        %1070 = vmatmul.mubr.f32.gmra.mxu0 %v985
        %v1071 = vpop.f32.mrf.mxu0
        %v1072 = vadd.f32 %v973, %v1071
        %v1073 = vpop.f32.mrf.mxu0
        %v1074 = vadd.f32 %v974, %v1073
        %1075 = vdwg.mxu0
        %v1076 = vmul.f32 %v937, 1.442695
        %v1077 = vpow.pop %v1076
        %v1078 = vmul.f32 %v939, 1.442695
        %v1079 = vpow.pop %v1078
        %v1080 = vmul.f32 %v943, 1.442695
        %v1081 = vpow.pop %v1080
        %v1082 = vmul.f32 %v945, 1.442695
        %v1083 = vpow.pop %v1082
        %v1084 = vmul.f32 %v949, 1.442695
        %v1085 = vpow.pop %v1084
        %v1086 = vmul.f32 %v951, 1.442695
        %v1087 = vpow.pop %v1086
        %v1088 = vmul.f32 %v955, 1.442695
        %v1089 = vpow.pop %v1088
        %v1090 = vmul.f32 %v957, 1.442695
        %v1091 = vpow.pop %v1090
        %1092 = vst [vmem:[%s455] sm:$0xff] %v1077
        %1093 = vst [vmem:[%s455 + $0x8] sm:$0xff] %v1079
        %1094 = vst [vmem:[%s455 + $0x10] sm:$0xff] %v1081
        %1095 = vst [vmem:[%s455 + $0x18] sm:$0xff] %v1083
        %1096 = vst [vmem:[%s455 + $0x20] sm:$0xff] %v1085
        %1097 = vst [vmem:[%s455 + $0x28] sm:$0xff] %v1087
        %1098 = vst [vmem:[%s455 + $0x30] sm:$0xff] %v1089
        %1099 = vst [vmem:[%s455 + $0x38] sm:$0xff] %v1091
        %1100 = vst [vmem:[%s460] sm:$0xff] %v1054
        %1101 = vst [vmem:[%s460 + $0x8] sm:$0xff] %v1056
        %1102 = vst [vmem:[%s460 + $0x10] sm:$0xff] %v1060
        %1103 = vst [vmem:[%s460 + $0x18] sm:$0xff] %v1062
        %1104 = vst [vmem:[%s460 + $0x20] sm:$0xff] %v1066
        %1105 = vst [vmem:[%s460 + $0x28] sm:$0xff] %v1068
        %1106 = vst [vmem:[%s460 + $0x30] sm:$0xff] %v1072
        %1107 = vst [vmem:[%s460 + $0x38] sm:$0xff] %v1074
        %p1108 = scmp.lt.s32.totalorder %s28, 7
        %s1109 = scalar_select %p1108, %s28, 7
        %s1110 = smul.addr %s1109, 8
        %s1111 = smul.addr %s1110, 8
        %s1112 = scalar_lea.vmem %s9, %s1111
        %p1113 = scmp.lt.s32.totalorder %s28, 7
        %s1114 = scalar_select %p1113, %s28, 7
        %s1115 = smul.addr %s1114, 8
        %s1116 = smul.addr %s1115, 8
        %s1117 = scalar_lea.vmem %s10, %s1116
        // Predicated region
        $region81: #{kron_mlp_decoder_batched.1} parent=55 // pred_check
          %p1118 = pneg %p240
        $region82: #{kron_mlp_decoder_batched.1} parent=55 // pred_check_branch
          %1120 = sbr.rel (%p1118) target = $region84
        $region83: #{kron_mlp_decoder_batched.1} parent=55 // pred_region
          _
        $region84: #{kron_mlp_decoder_batched.1} parent=55 // pred_fallthru
          _
        // Predicated region
        $region85: #{kron_mlp_decoder_batched.1} parent=55 // pred_check
          %p1121 = pneg %p266
        $region86: #{kron_mlp_decoder_batched.1} parent=55 // pred_check_branch
          %1123 = sbr.rel (%p1121) target = $region88
        $region87: #{kron_mlp_decoder_batched.1} parent=55 // pred_region
          _
        $region88: #{kron_mlp_decoder_batched.1} parent=55 // pred_fallthru
          _
      $region56: #{kron_mlp_decoder_batched.1} parent=5 // pred_fallthru
        _
      %p1124 = scmp.le.s32.totalorder 2, %s23
      // Predicated region
      $region89: #{kron_mlp_decoder_batched.1} parent=5 // pred_check
        %p1125 = pneg %p1124
      $region90: #{kron_mlp_decoder_batched.1} parent=5 // pred_check_branch
        %1127 = sbr.rel (%p1125) target = $region92
      $region91: #{kron_mlp_decoder_batched.1} parent=5 // pred_region
        %s1128 = ssub.s32 %s23, 2
        // Predicated region
        $region93: #{kron_mlp_decoder_batched.1} parent=91 // pred_check
          %p1129 = pneg %p246
        $region94: #{kron_mlp_decoder_batched.1} parent=91 // pred_check_branch
          %1131 = sbr.rel (%p1129) target = $region96
        $region95: #{kron_mlp_decoder_batched.1} parent=91 // pred_region
          %p1132 = scmp.lt.s32.totalorder %s29, 7
          %s1133 = scalar_select %p1132, %s29, 7
          %s1134 = smul.addr %s1133, 8
          %s1135 = smul.addr %s1134, 8
          %s1136 = scalar_lea.vmem %s9, %s1135
        $region96: #{kron_mlp_decoder_batched.1} parent=91 // pred_fallthru
          _
        // Predicated region
        $region97: #{kron_mlp_decoder_batched.1} parent=91 // pred_check
          %p1137 = pneg %p272
        $region98: #{kron_mlp_decoder_batched.1} parent=91 // pred_check_branch
          %1139 = sbr.rel (%p1137) target = $region100
        $region99: #{kron_mlp_decoder_batched.1} parent=91 // pred_region
          %p1140 = scmp.lt.s32.totalorder %s29, 7
          %s1141 = scalar_select %p1140, %s29, 7
          %s1142 = smul.addr %s1141, 8
          %s1143 = smul.addr %s1142, 8
          %s1144 = scalar_lea.vmem %s10, %s1143
        $region100: #{kron_mlp_decoder_batched.1} parent=91 // pred_fallthru
          _
      $region92: #{kron_mlp_decoder_batched.1} parent=5 // pred_fallthru
        _
    $region6: #{kron_mlp_decoder_batched.1} parent=1 // loop_footer
      %s27 = sadd.s32 1, %s23
    $region7: #{kron_mlp_decoder_batched.1} parent=1 // loop_footer_branch
      %22 = sbr.rel target = $region3
    $region8: #{kron_mlp_decoder_batched.1} parent=1 // loop_exit
      _
    %1145 = vsyncpa [#allocation3], 1
    %s1146 = scalar_lea.sflag [#allocation3], 1
    %1147 = vsyncpa %s1146, 1
    %1148 = vsyncpa [#allocation5], 1
    %1149 = vsyncpa [#allocation8], 1
    %1150 = vsyncpa [#allocation11], 1

</llo_original>
